<compile_context>
chip_gen: v5e
topology: v5e:2x2
jax: 0.10.0
libtpu: 0.0.40
codegen_flags: <defaults>
</compile_context>

<pallas_src>
import functools

import jax
import jax.numpy as jnp
from jax.experimental import pallas as pl
from jax.experimental.pallas import tpu as pltpu

HIDDEN = 32
LANE = 128
NEG_INF_BIAS = -1e30  # bias for padded class columns -> exp() underflows to 0


def _round_up(n, m):
    return ((n + m - 1) // m) * m


def mlp_small_kernel(x_ref, w1_ref, b1_ref, w2_ref, b2_ref, o_ref):
    # In-kernel bf16 cast of the activations (VPU has slack); MXU matmuls
    # accumulate in f32; bias/ReLU/softmax stay in f32.
    x = x_ref[...].astype(jnp.bfloat16)
    h = jnp.dot(x, w1_ref[...], preferred_element_type=jnp.float32)
    h = jnp.maximum(h + b1_ref[...], 0.0)

    logits = jnp.dot(h.astype(jnp.bfloat16), w2_ref[...],
                     preferred_element_type=jnp.float32) + b2_ref[...]

    # Numerically stable softmax over the padded, lane-dense class axis.
    # Padded columns carry a -1e30 bias, so exp() makes them exactly 0 and
    # the denominator equals the true y_dim-class denominator.
    m = jnp.max(logits, axis=-1, keepdims=True)
    e = jnp.exp(logits - m)
    denom = jnp.sum(e, axis=-1, keepdims=True)
    o_ref[...] = (e * pl.reciprocal(denom)).astype(o_ref.dtype)


def prepare_params(w1, b1, w2, b2):
    """One-time parameter prep (outside the per-call forward): transpose
    PyTorch-layout weights to (in, out), cast matmul operands to bf16, pad
    the class dim to a lane-dense 128 with a -1e30 bias on the pads."""
    hidden, _ = w1.shape
    y_dim = w2.shape[0]
    y_pad = _round_up(y_dim, LANE)

    w1_t = w1.T.astype(jnp.bfloat16)                          # (x_dim, 32)
    w2_t = jnp.zeros((hidden, y_pad), jnp.bfloat16)
    w2_t = w2_t.at[:, :y_dim].set(w2.T.astype(jnp.bfloat16))  # (32, y_pad)
    b1_2d = b1.reshape(1, hidden).astype(jnp.float32)         # (1, 32)
    b2_2d = jnp.full((1, y_pad), NEG_INF_BIAS, jnp.float32)
    b2_2d = b2_2d.at[0, :y_dim].set(b2.astype(jnp.float32))   # (1, y_pad)
    return w1_t, b1_2d, w2_t, b2_2d, y_dim


@functools.partial(jax.jit,
                   static_argnames=("y_dim", "block_b", "out_dtype", "trim"))
def mlp_small_forward(x, w1_t, b1_2d, w2_t, b2_2d, *, y_dim,
                      block_b=8192, out_dtype=jnp.bfloat16, trim=True):
    """x: (B, x_dim) f32/bf16; params from prepare_params.

    trim=True  -> (B, y_dim) softmax probabilities (PyTorch-shaped output).
    trim=False -> padded lane-dense (B, 128) block (columns >= y_dim are 0);
                  preferred for perf-sensitive consumers (no extra HBM pass).
    block_b: tune per generation if desired (8192 for v6e/v7x, 4096 for v5e).
    """
    B, x_dim = x.shape
    hidden = w1_t.shape[1]
    y_pad = w2_t.shape[1]
    out_bytes = jnp.dtype(out_dtype).itemsize

    # Batch tile: big enough to amortize per-step overhead, but capped at
    # cdiv(B, 2) so we get >= 2 tiles whenever possible (v7x dual TC).
    tb = min(block_b, _round_up(pl.cdiv(B, 2), 8))
    tb = max(8, (tb // 8) * 8)
    num_tiles = pl.cdiv(B, tb)  # ragged tail handled by partial-block writes

    # Derive the scoped-VMEM request from the tile (double-buffered input /
    # output streams + f32 temporaries), with headroom.  Keeps large tiles
    # compiling on v5e (16 MiB scoped default) and within v7x's 64 MiB part.
    per_row = 2 * x_dim * 4 + 2 * y_pad * out_bytes + 2048
    vmem_needed = tb * per_row + 2 * (x_dim * hidden + hidden * y_pad) * 2
    vmem_limit = int(min(48 << 20, max(32 << 20, int(vmem_needed * 1.5))))

    cost = pl.CostEstimate(
        flops=2 * B * (x_dim * hidden + hidden * y_pad),
        transcendentals=B * y_pad,
        bytes_accessed=(B * x_dim * x.dtype.itemsize
                        + B * y_pad * out_bytes
                        + (x_dim * hidden + hidden * y_pad) * 2
                        + (hidden + y_pad) * 4),
    )

    out = pl.pallas_call(
        mlp_small_kernel,
        out_shape=jax.ShapeDtypeStruct((B, y_pad), out_dtype),
        grid=(num_tiles,),
        in_specs=[
            pl.BlockSpec((tb, x_dim), lambda i: (i, 0)),       # batch-tiled x
            pl.BlockSpec((x_dim, hidden), lambda i: (0, 0)),   # resident W1
            pl.BlockSpec((1, hidden), lambda i: (0, 0)),       # resident b1
            pl.BlockSpec((hidden, y_pad), lambda i: (0, 0)),   # resident W2
            pl.BlockSpec((1, y_pad), lambda i: (0, 0)),        # resident b2
        ],
        out_specs=pl.BlockSpec((tb, y_pad), lambda i: (i, 0)),  # lane-dense
        compiler_params=pltpu.CompilerParams(
            dimension_semantics=("parallel",),
            vmem_limit_bytes=vmem_limit),
        cost_estimate=cost,
    )(x, w1_t, b1_2d, w2_t, b2_2d)

    if trim:
        # Drop the padded class columns (extra HBM pass; prefer trim=False
        # and let the consumer fuse/ignore the zero columns).
        return out[:, :y_dim]
    return out


if __name__ == "__main__":
    # Small shapes consistent with the module's forward: x is (batch, x_dim).
    B, X_DIM, Y_DIM = 8, 16, 8

    key = jax.random.PRNGKey(0)
    kx, k1, kb1, k2, kb2 = jax.random.split(key, 5)

    x = jax.random.normal(kx, (B, X_DIM), dtype=jnp.float32)

    # Deterministic parameter init (PyTorch nn.Linear-style uniform bounds).
    bound1 = 1.0 / (X_DIM ** 0.5)
    w1 = jax.random.uniform(k1, (HIDDEN, X_DIM), minval=-bound1, maxval=bound1,
                            dtype=jnp.float32)
    b1 = jax.random.uniform(kb1, (HIDDEN,), minval=-bound1, maxval=bound1,
                            dtype=jnp.float32)
    bound2 = 1.0 / (HIDDEN ** 0.5)
    w2 = jax.random.uniform(k2, (Y_DIM, HIDDEN), minval=-bound2, maxval=bound2,
                            dtype=jnp.float32)
    b2 = jax.random.uniform(kb2, (Y_DIM,), minval=-bound2, maxval=bound2,
                            dtype=jnp.float32)

    # Prepare parameters once (transpose / pad / cast happen outside forward).
    w1_t, b1_2d, w2_t, b2_2d, y_dim = prepare_params(w1, b1, w2, b2)

    # Perf path: padded lane-dense bf16 output, no wrapper slice.
    out_padded = mlp_small_forward(x, w1_t, b1_2d, w2_t, b2_2d,
                                   y_dim=y_dim, trim=False)
    out_padded = jax.block_until_ready(out_padded)
    assert out_padded.shape == (B, _round_up(Y_DIM, LANE))
    # Padded class columns must be exactly zero under the -1e30 bias.
    assert jnp.all(out_padded[:, Y_DIM:] == 0.0)

    out = out_padded[:, :Y_DIM].astype(jnp.float32)

    # Drop-in (PyTorch-shaped) path also works.
    out_trimmed = jax.block_until_ready(
        mlp_small_forward(x, w1_t, b1_2d, w2_t, b2_2d, y_dim=y_dim, trim=True))
    assert out_trimmed.shape == (B, Y_DIM)

    # Reference #1: mirrors the kernel's bf16-operand / f32-accumulate math.
    xb = x.astype(jnp.bfloat16)
    h = jnp.maximum(
        jnp.dot(xb, w1.T.astype(jnp.bfloat16),
                preferred_element_type=jnp.float32) + b1, 0.0)
    logits = jnp.dot(h.astype(jnp.bfloat16), w2.T.astype(jnp.bfloat16),
                     preferred_element_type=jnp.float32) + b2
    ref_bf16 = jax.nn.softmax(logits, axis=1)

    # Reference #2: pure-f32 PyTorch semantics.
    ref_f32 = jax.nn.softmax(jnp.maximum(x @ w1.T + b1, 0.0) @ w2.T + b2,
                             axis=1)

    # Tolerances relaxed for the bf16 output store (probabilities carry
    # ~3 significant digits).
    assert jnp.allclose(out, ref_bf16, atol=1e-2, rtol=1e-2)
    assert jnp.allclose(out, ref_f32, atol=5e-2)
    assert jnp.allclose(jnp.sum(out, axis=1), 1.0, atol=2e-2)
    assert jnp.allclose(out_trimmed.astype(jnp.float32), out, atol=1e-6)

    print("KERNEL_OK")
</pallas_src>

<mosaic_0001>
module attributes {stable_mosaic.version = 11 : i64} {
  func.func @mlp_small_kernel(%arg0: i32, %arg1: memref<8x16xf32, #tpu.memory_space<vmem>>, %arg2: memref<16x32xbf16, #tpu.memory_space<vmem>>, %arg3: memref<1x32xf32, #tpu.memory_space<vmem>>, %arg4: memref<32x128xbf16, #tpu.memory_space<vmem>>, %arg5: memref<1x128xf32, #tpu.memory_space<vmem>>, %arg6: memref<8x128xbf16, #tpu.memory_space<vmem>>) attributes {dimension_semantics = [#tpu.dimension_semantics<parallel>], iteration_bounds = array<i64: 1>, scalar_prefetch = 0 : i64, scratch_operands = 0 : i64, tpu.core_type = #tpu.core_type<tc>, window_params = [{transform_indices = @transform_0, window_bounds = array<i64: 8, 16>}, {pipeline_mode = #tpu.pipeline_mode<synchronous>, transform_indices = @transform_1, window_bounds = array<i64: 16, 32>}, {pipeline_mode = #tpu.pipeline_mode<synchronous>, transform_indices = @transform_2, window_bounds = array<i64: 1, 32>}, {pipeline_mode = #tpu.pipeline_mode<synchronous>, transform_indices = @transform_3, window_bounds = array<i64: 32, 128>}, {pipeline_mode = #tpu.pipeline_mode<synchronous>, transform_indices = @transform_4, window_bounds = array<i64: 1, 128>}, {transform_indices = @transform_5, window_bounds = array<i64: 8, 128>}]} {
    %c0 = arith.constant 0 : index
    %c0_0 = arith.constant 0 : index
    %0 = vector.load %arg1[%c0, %c0_0] : memref<8x16xf32, #tpu.memory_space<vmem>>, vector<8x16xf32>
    %1 = arith.truncf %0 : vector<8x16xf32> to vector<8x16xbf16>
    %c0_1 = arith.constant 0 : index
    %c0_2 = arith.constant 0 : index
    %2 = vector.load %arg2[%c0_1, %c0_2] : memref<16x32xbf16, #tpu.memory_space<vmem>>, vector<16x32xbf16>
    %cst = arith.constant dense<0.000000e+00> : vector<8x32xf32>
    %3 = tpu.matmul %1, %2, %cst {dimension_numbers = #tpu.dot_dimension_numbers<[1], [0], [0], [1], [0, 0, 1, 1], [], []>} : vector<8x16xbf16>, vector<16x32xbf16>, vector<8x32xf32> -> vector<8x32xf32>
    %c0_3 = arith.constant 0 : index
    %c0_4 = arith.constant 0 : index
    %4 = vector.load %arg3[%c0_3, %c0_4] : memref<1x32xf32, #tpu.memory_space<vmem>>, vector<1x32xf32>
    %5 = vector.broadcast %4 : vector<1x32xf32> to vector<8x32xf32>
    %6 = arith.addf %3, %5 : vector<8x32xf32>
    %cst_5 = arith.constant 0.000000e+00 : f32
    %7 = vector.broadcast %cst_5 : f32 to vector<8x32xf32>
    %8 = arith.maximumf %6, %7 : vector<8x32xf32>
    %9 = arith.truncf %8 : vector<8x32xf32> to vector<8x32xbf16>
    %c0_6 = arith.constant 0 : index
    %c0_7 = arith.constant 0 : index
    %10 = vector.load %arg4[%c0_6, %c0_7] : memref<32x128xbf16, #tpu.memory_space<vmem>>, vector<32x128xbf16>
    %cst_8 = arith.constant dense<0.000000e+00> : vector<8x128xf32>
    %11 = tpu.matmul %9, %10, %cst_8 {dimension_numbers = #tpu.dot_dimension_numbers<[1], [0], [0], [1], [0, 0, 1, 1], [], []>} : vector<8x32xbf16>, vector<32x128xbf16>, vector<8x128xf32> -> vector<8x128xf32>
    %c0_9 = arith.constant 0 : index
    %c0_10 = arith.constant 0 : index
    %12 = vector.load %arg5[%c0_9, %c0_10] : memref<1x128xf32, #tpu.memory_space<vmem>>, vector<1x128xf32>
    %13 = vector.broadcast %12 : vector<1x128xf32> to vector<8x128xf32>
    %14 = arith.addf %11, %13 : vector<8x128xf32>
    %cst_11 = arith.constant dense<0xFF800000> : vector<8xf32>
    %15 = vector.multi_reduction <maximumf>, %14, %cst_11 [1] : vector<8x128xf32> to vector<8xf32>
    %16 = vector.shape_cast %15 : vector<8xf32> to vector<8x1xf32>
    %17 = vector.broadcast %16 : vector<8x1xf32> to vector<8x128xf32>
    %18 = arith.subf %14, %17 : vector<8x128xf32>
    %19 = math.exp %18 : vector<8x128xf32>
    %cst_12 = arith.constant dense<0.000000e+00> : vector<8xf32>
    %20 = vector.multi_reduction <add>, %19, %cst_12 [1] : vector<8x128xf32> to vector<8xf32>
    %21 = vector.shape_cast %20 : vector<8xf32> to vector<8x1xf32>
    %22 = tpu.reciprocal %21 : vector<8x1xf32> -> vector<8x1xf32>
    %23 = vector.broadcast %22 : vector<8x1xf32> to vector<8x128xf32>
    %24 = arith.mulf %19, %23 : vector<8x128xf32>
    %25 = arith.truncf %24 : vector<8x128xf32> to vector<8x128xbf16>
    %c0_13 = arith.constant 0 : index
    %c0_14 = arith.constant 0 : index
    %26 = vector.load %arg6[%c0_13, %c0_14] : memref<8x128xbf16, #tpu.memory_space<vmem>>, vector<8x128xbf16>
    tpu.vector_store %arg6[%c0_13, %c0_14], %25 {strides = array<i32>} : memref<8x128xbf16, #tpu.memory_space<vmem>>, vector<8x128xbf16>,
    return
  }
  func.func @transform_0(%arg0: i32) -> (i32, i32) {
    %c0_i32 = arith.constant 0 : i32
    %c0_i32_0 = arith.constant 0 : i32
    return %arg0, %c0_i32 : i32, i32
  }
  func.func @transform_1(%arg0: i32) -> (i32, i32) {
    %c0_i32 = arith.constant 0 : i32
    %c0_i32_0 = arith.constant 0 : i32
    %c0_i32_1 = arith.constant 0 : i32
    return %c0_i32, %c0_i32_0 : i32, i32
  }
  func.func @transform_2(%arg0: i32) -> (i32, i32) {
    %c0_i32 = arith.constant 0 : i32
    %c0_i32_0 = arith.constant 0 : i32
    %c0_i32_1 = arith.constant 0 : i32
    return %c0_i32, %c0_i32_0 : i32, i32
  }
  func.func @transform_3(%arg0: i32) -> (i32, i32) {
    %c0_i32 = arith.constant 0 : i32
    %c0_i32_0 = arith.constant 0 : i32
    %c0_i32_1 = arith.constant 0 : i32
    return %c0_i32, %c0_i32_0 : i32, i32
  }
  func.func @transform_4(%arg0: i32) -> (i32, i32) {
    %c0_i32 = arith.constant 0 : i32
    %c0_i32_0 = arith.constant 0 : i32
    %c0_i32_1 = arith.constant 0 : i32
    return %c0_i32, %c0_i32_0 : i32, i32
  }
  func.func @transform_5(%arg0: i32) -> (i32, i32) {
    %c0_i32 = arith.constant 0 : i32
    %c0_i32_0 = arith.constant 0 : i32
    return %arg0, %c0_i32 : i32, i32
  }
}

</mosaic_0001>

<llo_original>
// kernel: mlp_small_forward.1
$region0: #{mlp_small_forward.1}
  #allocation0 [shape = 'u32[]', space=smem, size = 0x4, offset = 0x4, fixed_abs, tag = 'smem constant byte address 0x4 - core index']
  #allocation1 [shape = 'u32[72,128]{1,0:T(1,128)}', space=vmem, size = 0x9000, scoped, tag = 'internal scratch']
  %s0 = inlined_call_operand.hbm [shape: f32[8,16], index: 0, kind: input, shape index: {}]
  %s1 = inlined_call_operand.hbm [shape: bf16[16,32], index: 1, kind: input, shape index: {}]
  %s2 = inlined_call_operand.vmem [shape: f32[1,32], index: 2, kind: input, shape index: {}]
  %s3 = inlined_call_operand.hbm [shape: bf16[32,128], index: 3, kind: input, shape index: {}]
  %s4 = inlined_call_operand.vmem [shape: f32[1,128], index: 4, kind: input, shape index: {}]
  %s5 = inlined_call_operand.hbm [shape: bf16[8,128], index: 5, kind: output, shape index: {}]
  %s6 = sld [smem:[#allocation0]]
  $region42: #{mlp_small_forward.1} parent=0
    _
  %s8 = ssub.s32 1, %s6
  %s9 = scalar_select 0, %s8, %s6
  $region1: #{mlp_small_forward.1} parent=0
    #allocation2 [shape = 'u8[4096]{0}', space=vmem, size = 0x1000, scoped, tag = 'input window, operand 0, single buffered']
    #allocation3 [shape = 's32[1]{0}', space=sflag, size = 0x4, scoped, tag = 'scoped memory for mlp_small_forward.1']
    #allocation4 [shape = 's32[1]{0}', space=sflag, size = 0x4, scoped, tag = 'scoped memory for mlp_small_forward.1']
    #allocation5 [shape = 'u8[4096]{0}', space=vmem, size = 0x1000, scoped, tag = 'input window, operand 1, single buffered']
    #allocation6 [shape = 's32[1]{0}', space=sflag, size = 0x4, scoped, tag = 'scoped memory for mlp_small_forward.1']
    #allocation7 [shape = 'u8[8192]{0}', space=vmem, size = 0x2000, scoped, tag = 'input window, operand 3, single buffered']
    #allocation8 [shape = 'u8[2048]{0}', space=vmem, size = 0x800, scoped, tag = 'output window, operand 0, single buffered']
    %10 = vsyncpa [#allocation3], 0
    %11 = vsyncpa [#allocation6], 0
    %12 = vsyncpa [#allocation4], 0
    // Predicated region
    $region2: #{mlp_small_forward.1} parent=1 // pred_check
      _
    $region3: #{mlp_small_forward.1} parent=1 // pred_check_branch
      %14 = sbr.rel (0) target = $region5
    $region4: #{mlp_small_forward.1} parent=1 // pred_region
      %16 = vsyncadd [#allocation3], 0
      %s18 = sshll.u32 %s0, 4
      %s19 = int_to_ptr.hbm [resolvable:$true] %s18
      %s20 = sshll.u32 [#allocation2], 4
      %s21 = int_to_ptr.vmem [resolvable:$true] %s20
      %23 = dma.hbm_to_vmem [thread:$0]  %s19, 128, %s21, [#allocation3]
    $region5: #{mlp_small_forward.1} parent=1 // pred_fallthru
      _
    // Predicated region
    $region6: #{mlp_small_forward.1} parent=1 // pred_check
      _
    $region7: #{mlp_small_forward.1} parent=1 // pred_check_branch
      %25 = sbr.rel (0) target = $region9
    $region8: #{mlp_small_forward.1} parent=1 // pred_region
      %27 = vsyncadd [#allocation6], 0
      %s28 = sshll.u32 %s1, 4
      %s29 = int_to_ptr.hbm [resolvable:$true] %s28
      %s30 = sshll.u32 [#allocation5], 4
      %s31 = int_to_ptr.vmem [resolvable:$true] %s30
      %36 = dma.hbm_to_vmem [thread:$0]  %s29, 128, %s31, [#allocation6], 64, 64, 4
    $region9: #{mlp_small_forward.1} parent=1 // pred_fallthru
      _
    // Predicated region
    $region10: #{mlp_small_forward.1} parent=1 // pred_check
      _
    $region11: #{mlp_small_forward.1} parent=1 // pred_check_branch
      %38 = sbr.rel (0) target = $region13
    $region12: #{mlp_small_forward.1} parent=1 // pred_region
      _
    $region13: #{mlp_small_forward.1} parent=1 // pred_fallthru
      _
    // Predicated region
    $region14: #{mlp_small_forward.1} parent=1 // pred_check
      _
    $region15: #{mlp_small_forward.1} parent=1 // pred_check_branch
      %40 = sbr.rel (0) target = $region17
    $region16: #{mlp_small_forward.1} parent=1 // pred_region
      %42 = vsyncadd [#allocation6], 0
      %s43 = sshll.u32 %s3, 4
      %s44 = int_to_ptr.hbm [resolvable:$true] %s43
      %s45 = sshll.u32 [#allocation7], 4
      %s46 = int_to_ptr.vmem [resolvable:$true] %s45
      %51 = dma.hbm_to_vmem [thread:$0]  %s44, 256, %s46, [#allocation6], 64, 64, 4
    $region17: #{mlp_small_forward.1} parent=1 // pred_fallthru
      _
    // Predicated region
    $region18: #{mlp_small_forward.1} parent=1 // pred_check
      _
    $region19: #{mlp_small_forward.1} parent=1 // pred_check_branch
      %53 = sbr.rel (0) target = $region21
    $region20: #{mlp_small_forward.1} parent=1 // pred_region
      _
    $region21: #{mlp_small_forward.1} parent=1 // pred_fallthru
      _
    // Predicated region
    $region22: #{mlp_small_forward.1} parent=1 // pred_check
      _
    $region23: #{mlp_small_forward.1} parent=1 // pred_check_branch
      %55 = sbr.rel (0) target = $region25
    $region24: #{mlp_small_forward.1} parent=1 // pred_region
      %57 = dma.done [#allocation3], 128
    $region25: #{mlp_small_forward.1} parent=1 // pred_fallthru
      _
    // Predicated region
    $region26: #{mlp_small_forward.1} parent=1 // pred_check
      _
    $region27: #{mlp_small_forward.1} parent=1 // pred_check_branch
      %59 = sbr.rel (0) target = $region29
    $region28: #{mlp_small_forward.1} parent=1 // pred_region
      %61 = dma.done [#allocation6], 128
    $region29: #{mlp_small_forward.1} parent=1 // pred_fallthru
      _
    // Predicated region
    $region30: #{mlp_small_forward.1} parent=1 // pred_check
      _
    $region31: #{mlp_small_forward.1} parent=1 // pred_check_branch
      %63 = sbr.rel (0) target = $region33
    $region32: #{mlp_small_forward.1} parent=1 // pred_region
      %65 = dma.done [#allocation6], 256
    $region33: #{mlp_small_forward.1} parent=1 // pred_fallthru
      _
    %v67 = vld [vmem:[#allocation2] sm:$0xff]
    %v68 = vpack.c.bf16 %v67, %v67
    %v69 = vld [vmem:[#allocation5] sm:$0xf]
    %v70 = vld [vmem:[#allocation5 + $0x4] sm:$0xf]
    %v71 = vld [vmem:[%s2] sm:$0x1]
    %v73 = vperm.slane %v71, 0
    %v77 = vunpack.c.l.b16 %v69
    %v78 = vunpack.c.l.b16 %v70
    %v79 = vpack.c.b16 %v78, %v77
    %vm81 = vcmask 130048
    %v83 = vsel %vm81, %v68, 0
    %85 = vmatpush.bf16.msra.mxu0 0
    %86 = vmatpush.bf16.msra.mxu0 0
    %87 = vmatpush.bf16.msra.mxu0 0
    %88 = vmatpush.bf16.msra.mxu0 0
    %89 = vmatpush.bf16.msra.mxu0 0
    %90 = vmatpush.bf16.msra.mxu0 0
    %91 = vmatpush.bf16.msra.mxu0 0
    %92 = vmatpush.bf16.msra.mxu0 %v79
    %93 = vmatmul.bf16.gmra.mxu0 %v83
    %v94 = vpop.f32.mrf.mxu0
    %v95 = vadd.f32 %v73, %v94
    %v96 = vpop.f32.mrf.mxu0
    %97 = vdwg.mxu0
    %v98 = vmax.f32 %v95, 0.0
    %v99 = vpack.c.bf16 %v98, %v98
    %v100 = vld [vmem:[#allocation7] sm:$0xf]
    %v101 = vld [vmem:[#allocation7 + $0x4] sm:$0xf]
    %v102 = vld [vmem:[#allocation7 + $0x8] sm:$0xf]
    %v103 = vld [vmem:[#allocation7 + $0xc] sm:$0xf]
    %v104 = vld [vmem:[%s4] sm:$0x1]
    %v106 = vperm.slane %v104, 0
    %v112 = vunpack.c.l.b16 %v100
    %v113 = vunpack.c.l.b16 %v101
    %v114 = vunpack.c.l.b16 %v102
    %v115 = vunpack.c.l.b16 %v103
    %v116 = vpack.c.b16 %v113, %v112
    %v117 = vpack.c.b16 %v115, %v114
    %vm120 = vcmask 261120
    %v122 = vsel %vm120, %v99, 0
    %124 = vmatpush.bf16.msra.mxu0 0
    %125 = vmatpush.bf16.msra.mxu0 0
    %126 = vmatpush.bf16.msra.mxu0 0
    %127 = vmatpush.bf16.msra.mxu0 0
    %128 = vmatpush.bf16.msra.mxu0 0
    %129 = vmatpush.bf16.msra.mxu0 0
    %130 = vmatpush.bf16.msra.mxu0 %v117
    %131 = vmatpush.bf16.msra.mxu0 %v116
    %132 = vmatmul.bf16.gmra.mxu0 %v122
    %v133 = vpop.f32.mrf.mxu0
    %v134 = vadd.f32 %v106, %v133
    %v135 = vpop.f32.mrf.mxu0
    %136 = vdwg.mxu0
    %137 = vmax.xlane.f32.xlu0 %v134
    %v138 = vpop.xlane.xlu0 %137
    %v139 = vsub.f32 %v134, %v138
    %v140 = vmul.f32 %v139, 1.442695
    %v141 = vpow.pop %v140
    %142 = vadd.xlane.f32.xlu0 %v141
    %v143 = vpop.xlane.xlu0 %142
    %v144 = vrcp.pop %v143
    %v145 = vmul.f32 %v143, %v144
    %v146 = vsub.f32 1.0, %v145
    %v147 = vmul.f32 %v144, %v146
    %v148 = vadd.f32 %v144, %v147
    %vm149 = vweird.f32 %v143
    %vm150 = vweird.f32 %v144
    %vm151 = vmor %vm149, %vm150
    %v152 = vsel %vm151, %v144, %v148
    %v153 = vand.u32 2147483647, %v143
    %vm154 = vcmp.eq.f32.partialorder %v153, 8.507059e+37
    %v155 = vand.u32 %v143, 2147483648
    %v156 = vor.u32 1.1754944e-38, %v155
    %v157 = vsel %vm154, %v156, %v152
    %v158 = vmul.f32 %v141, %v157
    %v159 = vpack.c.bf16 %v158, %v158
    %160 = vst [vmem:[#allocation8] sm:$0xf] %v159
    // Predicated region
    $region34: #{mlp_small_forward.1} parent=1 // pred_check
      _
    $region35: #{mlp_small_forward.1} parent=1 // pred_check_branch
      %162 = sbr.rel (0) target = $region37
    $region36: #{mlp_small_forward.1} parent=1 // pred_region
      %164 = vsyncadd [#allocation4], 0
      %s166 = sshll.u32 [#allocation8], 4
      %s167 = int_to_ptr.vmem [resolvable:$true] %s166
      %s168 = sshll.u32 %s5, 4
      %s169 = int_to_ptr.hbm [resolvable:$true] %s168
      %171 = dma.vmem_to_hbm [thread:$0]  %s167, 64, %s169, [#allocation4]
    $region37: #{mlp_small_forward.1} parent=1 // pred_fallthru
      _
    // Predicated region
    $region38: #{mlp_small_forward.1} parent=1 // pred_check
      _
    $region39: #{mlp_small_forward.1} parent=1 // pred_check_branch
      %173 = sbr.rel (0) target = $region41
    $region40: #{mlp_small_forward.1} parent=1 // pred_region
      %175 = dma.done [#allocation4], 64
    $region41: #{mlp_small_forward.1} parent=1 // pred_fallthru
      _
    %176 = vsyncpa [#allocation3], 1
    %177 = vsyncpa [#allocation6], 1
    %178 = vsyncpa [#allocation4], 1

</llo_original>
